<compile_context>
chip_gen: v6e
topology: v6e:2x2x1
jax: 0.10.0
libtpu: 0.0.40
codegen_flags: <defaults>
</compile_context>

<pallas_src>
import functools

import jax
import jax.numpy as jnp
from jax.experimental import pallas as pl
from jax.experimental.pallas import tpu as pltpu


def _round_up(x, m):
    return ((x + m - 1) // m) * m


def _mlp_head_kernel(x_ref, w1_ref, b1_ref, w2_ref, b2_ref, w3_ref, b3_ref,
                     o_ref):
    """Fused 3-layer MLP head on one batch tile.

    x streams in its source dtype and is cast to bf16 in-kernel; matmuls
    accumulate in f32; bias add + ReLU stay f32 (v5e has no bf16 VPU path);
    the lane-dense output block is stored as bf16.  Weights/biases have
    constant block indices, so they are DMA'd once and stay VMEM-resident
    across the whole batch grid.
    """
    x = x_ref[...].astype(jnp.bfloat16)          # in-kernel cast (free filler)

    # Layer 1: Linear(in, 512) + ReLU.
    h1 = jnp.dot(x, w1_ref[...], preferred_element_type=jnp.float32)
    h1 = jnp.maximum(h1 + b1_ref[...], 0.0)
    # TODO(synk): dropout omitted (eval-mode forward); training-mode dropout
    # would use pltpu.prng_seed + pltpu.stateful_bernoulli here.

    # Layer 2: Linear(512, 256) + ReLU.
    h2 = jnp.dot(h1.astype(jnp.bfloat16), w2_ref[...],
                 preferred_element_type=jnp.float32)
    h2 = jnp.maximum(h2 + b2_ref[...], 0.0)

    # Layer 3: Linear(256, NC_PAD) -> lane-dense (128-wide) bf16 output block.
    out = jnp.dot(h2.astype(jnp.bfloat16), w3_ref[...],
                  preferred_element_type=jnp.float32)
    o_ref[...] = (out + b3_ref[...]).astype(o_ref.dtype)


def _pick_tile_b(batch, in_features, x_itemsize, tile_b_max):
    """Adaptive batch tile.

    Big enough to amortize the ~0.35 us per-grid-step pipeline overhead,
    >=2 grid steps when the batch allows it (v7x megacore sharding), padding
    waste bounded (tile ~= cdiv(B, n_steps)), and the double-buffered x stream
    kept under ~16 MiB so large in_features don't blow v7x's 64 MiB VMEM.
    """
    if batch <= 16:
        return _round_up(max(batch, 1), 8)            # single full-extent tile
    n_steps = max(2, pl.cdiv(batch, tile_b_max))      # >=2 steps for 2-TC v7x
    tile = min(_round_up(pl.cdiv(batch, n_steps), 16), tile_b_max)
    max_rows = ((16 << 20) // max(2 * in_features * x_itemsize, 1)) // 16 * 16
    return max(16, min(tile, max_rows))


@functools.partial(jax.jit, static_argnames=("num_classes", "tile_b_max"))
def classification_head_forward(x, prepared_params, *, num_classes,
                                tile_b_max=1024):
    """Fused MLP classification head via one gridded pallas_call.

    `prepared_params` must come from prepare_params() (one-time padded bf16
    weights / f32 biases), so this per-call wrapper does no weight traffic and
    at most one cheap zero-pad of the batch dimension.
    """
    w1, b1, w2, b2, w3, b3 = prepared_params
    B, in_features = x.shape
    H1, H2 = w1.shape[1], w2.shape[1]                 # 512, 256
    nc_pad = w3.shape[1]                              # num_classes padded to 128

    TILE_B = _pick_tile_b(B, in_features, x.dtype.itemsize, tile_b_max)
    B_pad = _round_up(B, TILE_B)
    grid = (B_pad // TILE_B,)

    # Only batch padding (zeros, no dtype cast) happens per call; the feature
    # dim uses a full-extent block, so no 128-padding of x is needed.
    xb = x if B_pad == B else jnp.pad(x, ((0, B_pad - B), (0, 0)))

    # VMEM budget: double-buffered x/out streams + resident (double-buffered)
    # weights/biases + f32 intermediates and their bf16 casts, plus headroom
    # for compiler-internal scratch, capped at 0.75x of physical VMEM.
    dbl = 2
    weights_bytes = (in_features * H1 + H1 * H2 + H2 * nc_pad) * 2 * dbl
    bias_bytes = (H1 + H2 + nc_pad) * 4 * dbl
    stream_bytes = dbl * TILE_B * (in_features * x.dtype.itemsize + nc_pad * 2)
    interm_bytes = TILE_B * (in_features * 2            # bf16 cast of x
                             + H1 * (4 + 2)             # f32 h1 + bf16 cast
                             + H2 * (4 + 2)             # f32 h2 + bf16 cast
                             + nc_pad * 4)              # f32 out pre-store
    try:
        vmem_cap = int(pltpu.get_tpu_info().vmem_capacity_bytes)
    except Exception:                                    # conservative (v7x)
        vmem_cap = 64 * 1024 * 1024
    vmem_limit = weights_bytes + bias_bytes + stream_bytes + interm_bytes
    vmem_limit = min(max(vmem_limit + (6 << 20), 16 << 20),
                     int(0.75 * vmem_cap))

    out = pl.pallas_call(
        _mlp_head_kernel,
        out_shape=jax.ShapeDtypeStruct((B_pad, nc_pad), jnp.bfloat16),
        grid_spec=pltpu.PrefetchScalarGridSpec(
            num_scalar_prefetch=0,
            grid=grid,
            in_specs=[
                # Batch tile streams across the grid (double-buffered).
                pl.BlockSpec((TILE_B, in_features), lambda i: (i, 0)),
                # Weights / biases: constant block index -> DMA'd once, resident.
                # TODO(synk): for very large in_features, single-buffer these
                # (pipeline_mode=pl.Buffered(1)) and K-tile layer 1 with an f32
                # accumulator so the w1 block fits v7x's 64 MiB VMEM.
                pl.BlockSpec((in_features, H1), lambda i: (0, 0)),
                pl.BlockSpec((1, H1), lambda i: (0, 0)),
                pl.BlockSpec((H1, H2), lambda i: (0, 0)),
                pl.BlockSpec((1, H2), lambda i: (0, 0)),
                pl.BlockSpec((H2, nc_pad), lambda i: (0, 0)),
                pl.BlockSpec((1, nc_pad), lambda i: (0, 0)),
            ],
            # bf16 lane-dense output: unmasked full-lane stores, half the
            # writeback of padded f32.  (Alternative to benchmark: unpadded
            # (TILE_B, num_classes) out_spec with masked stores.)
            out_specs=pl.BlockSpec((TILE_B, nc_pad), lambda i: (i, 0)),
        ),
        compiler_params=pltpu.CompilerParams(
            dimension_semantics=("parallel",),    # v7x: shard batch over 2 TCs
            vmem_limit_bytes=int(vmem_limit),
        ),
    )(xb, w1, b1, w2, b2, w3, b3)

    # Slice off batch/class padding, restore caller dtype (one fused XLA op).
    return out[:B, :num_classes].astype(x.dtype)


def prepare_params(params):
    """One-time conversion of f32 [in,out]-layout params to the kernel layout.

    Pads num_classes to 128 lanes and casts weights to bf16 / biases to f32
    once, so repeated forward calls pay zero weight pad/cast HBM traffic.
    Returns (prepared_params, num_classes).
    """
    w1, b1, w2, b2, w3, b3 = params
    num_classes = w3.shape[1]
    ncp = _round_up(num_classes, 128)
    w3p = jnp.pad(w3, ((0, 0), (0, ncp - num_classes)))
    b3p = jnp.pad(b3, ((0, 0), (0, ncp - num_classes)))
    prepared = (w1.astype(jnp.bfloat16), b1.astype(jnp.float32),
                w2.astype(jnp.bfloat16), b2.astype(jnp.float32),
                w3p.astype(jnp.bfloat16), b3p.astype(jnp.float32))
    return prepared, num_classes


def classification_head_apply(x, params, prepared, num_classes, *,
                              min_pallas_batch=128):
    """Deployment entry point.

    Tiny batches go through plain XLA (which fuses this 3-layer head and beats
    kernel launch + DMA overhead); batches that fill the MXU M dimension use
    the fused Pallas kernel.
    """
    if x.shape[0] < min_pallas_batch:
        return reference_forward(x, params)
    return classification_head_forward(x, prepared, num_classes=num_classes)


def init_params(key, in_features, num_classes=4):
    """Deterministic synthetic params (PyTorch-Linear-like uniform init).

    Weights kept as [in_dim, out_dim] (already transposed vs torch)."""
    dims = [(in_features, 512), (512, 256), (256, num_classes)]
    params = []
    for fan_in, fan_out in dims:
        key, kw, kb = jax.random.split(key, 3)
        bound = 1.0 / jnp.sqrt(fan_in)
        w = jax.random.uniform(kw, (fan_in, fan_out), jnp.float32,
                               minval=-bound, maxval=bound)
        b = jax.random.uniform(kb, (1, fan_out), jnp.float32,
                               minval=-bound, maxval=bound)
        params.extend([w, b])
    return tuple(params)


def reference_forward(x, params):
    """Pure-JAX f32 reference (eval-mode: dropout = identity)."""
    w1, b1, w2, b2, w3, b3 = params
    h1 = jnp.maximum(x @ w1 + b1, 0.0)
    h2 = jnp.maximum(h1 @ w2 + b2, 0.0)
    return h2 @ w3 + b3


if __name__ == "__main__":
    key = jax.random.PRNGKey(0)
    key, kx, kp = jax.random.split(key, 3)

    B = 8             # batch
    in_features = 32  # input feature dim
    num_classes = 4   # 优/良/中/差

    params = init_params(kp, in_features, num_classes)
    prepared, nc = prepare_params(params)

    # Single-tile path (full-extent batch block).
    x = jax.random.normal(kx, (B, in_features), jnp.float32)
    out = jax.block_until_ready(
        classification_head_forward(x, prepared, num_classes=nc))
    ref = reference_forward(x, params)
    assert out.shape == (B, num_classes), out.shape
    # bf16 weights/activations/output with f32 accumulation: loosened tolerance
    # vs the f32 reference (inference accuracy unaffected for a 4-class head).
    assert jnp.allclose(out, ref, atol=5e-2, rtol=5e-2), (
        float(jnp.max(jnp.abs(out - ref))))

    # Multi-tile path (grid > 1, padded batch rows).
    key, kx2 = jax.random.split(key)
    x2 = jax.random.normal(kx2, (40, in_features), jnp.float32)
    out2 = jax.block_until_ready(
        classification_head_forward(x2, prepared, num_classes=nc))
    ref2 = reference_forward(x2, params)
    assert out2.shape == (40, num_classes), out2.shape
    assert jnp.allclose(out2, ref2, atol=5e-2, rtol=5e-2), (
        float(jnp.max(jnp.abs(out2 - ref2))))

    print("KERNEL_OK")
</pallas_src>

<mosaic_0001>
module attributes {stable_mosaic.version = 11 : i64} {
  func.func @_mlp_head_kernel(%arg0: i32, %arg1: memref<8x32xf32, #tpu.memory_space<vmem>>, %arg2: memref<32x512xbf16, #tpu.memory_space<vmem>>, %arg3: memref<1x512xf32, #tpu.memory_space<vmem>>, %arg4: memref<512x256xbf16, #tpu.memory_space<vmem>>, %arg5: memref<1x256xf32, #tpu.memory_space<vmem>>, %arg6: memref<256x128xbf16, #tpu.memory_space<vmem>>, %arg7: memref<1x128xf32, #tpu.memory_space<vmem>>, %arg8: memref<8x128xbf16, #tpu.memory_space<vmem>>) attributes {dimension_semantics = [#tpu.dimension_semantics<parallel>], iteration_bounds = array<i64: 1>, scalar_prefetch = 0 : i64, scratch_operands = 0 : i64, tpu.core_type = #tpu.core_type<tc>, window_params = [{transform_indices = @transform_0, window_bounds = array<i64: 8, 32>}, {pipeline_mode = #tpu.pipeline_mode<synchronous>, transform_indices = @transform_1, window_bounds = array<i64: 32, 512>}, {pipeline_mode = #tpu.pipeline_mode<synchronous>, transform_indices = @transform_2, window_bounds = array<i64: 1, 512>}, {pipeline_mode = #tpu.pipeline_mode<synchronous>, transform_indices = @transform_3, window_bounds = array<i64: 512, 256>}, {pipeline_mode = #tpu.pipeline_mode<synchronous>, transform_indices = @transform_4, window_bounds = array<i64: 1, 256>}, {pipeline_mode = #tpu.pipeline_mode<synchronous>, transform_indices = @transform_5, window_bounds = array<i64: 256, 128>}, {pipeline_mode = #tpu.pipeline_mode<synchronous>, transform_indices = @transform_6, window_bounds = array<i64: 1, 128>}, {transform_indices = @transform_7, window_bounds = array<i64: 8, 128>}]} {
    %c0 = arith.constant 0 : index
    %c0_0 = arith.constant 0 : index
    %0 = vector.load %arg1[%c0, %c0_0] : memref<8x32xf32, #tpu.memory_space<vmem>>, vector<8x32xf32>
    %1 = arith.truncf %0 : vector<8x32xf32> to vector<8x32xbf16>
    %c0_1 = arith.constant 0 : index
    %c0_2 = arith.constant 0 : index
    %2 = vector.load %arg2[%c0_1, %c0_2] : memref<32x512xbf16, #tpu.memory_space<vmem>>, vector<32x512xbf16>
    %cst = arith.constant dense<0.000000e+00> : vector<8x512xf32>
    %3 = tpu.matmul %1, %2, %cst {dimension_numbers = #tpu.dot_dimension_numbers<[1], [0], [0], [1], [0, 0, 1, 1], [], []>} : vector<8x32xbf16>, vector<32x512xbf16>, vector<8x512xf32> -> vector<8x512xf32>
    %c0_3 = arith.constant 0 : index
    %c0_4 = arith.constant 0 : index
    %4 = vector.load %arg3[%c0_3, %c0_4] : memref<1x512xf32, #tpu.memory_space<vmem>>, vector<1x512xf32>
    %5 = vector.broadcast %4 : vector<1x512xf32> to vector<8x512xf32>
    %6 = arith.addf %3, %5 : vector<8x512xf32>
    %cst_5 = arith.constant 0.000000e+00 : f32
    %7 = vector.broadcast %cst_5 : f32 to vector<8x512xf32>
    %8 = arith.maximumf %6, %7 : vector<8x512xf32>
    %9 = arith.truncf %8 : vector<8x512xf32> to vector<8x512xbf16>
    %c0_6 = arith.constant 0 : index
    %c0_7 = arith.constant 0 : index
    %10 = vector.load %arg4[%c0_6, %c0_7] : memref<512x256xbf16, #tpu.memory_space<vmem>>, vector<512x256xbf16>
    %cst_8 = arith.constant dense<0.000000e+00> : vector<8x256xf32>
    %11 = tpu.matmul %9, %10, %cst_8 {dimension_numbers = #tpu.dot_dimension_numbers<[1], [0], [0], [1], [0, 0, 1, 1], [], []>} : vector<8x512xbf16>, vector<512x256xbf16>, vector<8x256xf32> -> vector<8x256xf32>
    %c0_9 = arith.constant 0 : index
    %c0_10 = arith.constant 0 : index
    %12 = vector.load %arg5[%c0_9, %c0_10] : memref<1x256xf32, #tpu.memory_space<vmem>>, vector<1x256xf32>
    %13 = vector.broadcast %12 : vector<1x256xf32> to vector<8x256xf32>
    %14 = arith.addf %11, %13 : vector<8x256xf32>
    %cst_11 = arith.constant 0.000000e+00 : f32
    %15 = vector.broadcast %cst_11 : f32 to vector<8x256xf32>
    %16 = arith.maximumf %14, %15 : vector<8x256xf32>
    %17 = arith.truncf %16 : vector<8x256xf32> to vector<8x256xbf16>
    %c0_12 = arith.constant 0 : index
    %c0_13 = arith.constant 0 : index
    %18 = vector.load %arg6[%c0_12, %c0_13] : memref<256x128xbf16, #tpu.memory_space<vmem>>, vector<256x128xbf16>
    %cst_14 = arith.constant dense<0.000000e+00> : vector<8x128xf32>
    %19 = tpu.matmul %17, %18, %cst_14 {dimension_numbers = #tpu.dot_dimension_numbers<[1], [0], [0], [1], [0, 0, 1, 1], [], []>} : vector<8x256xbf16>, vector<256x128xbf16>, vector<8x128xf32> -> vector<8x128xf32>
    %c0_15 = arith.constant 0 : index
    %c0_16 = arith.constant 0 : index
    %20 = vector.load %arg7[%c0_15, %c0_16] : memref<1x128xf32, #tpu.memory_space<vmem>>, vector<1x128xf32>
    %21 = vector.broadcast %20 : vector<1x128xf32> to vector<8x128xf32>
    %22 = arith.addf %19, %21 : vector<8x128xf32>
    %23 = arith.truncf %22 : vector<8x128xf32> to vector<8x128xbf16>
    %c0_17 = arith.constant 0 : index
    %c0_18 = arith.constant 0 : index
    %24 = vector.load %arg8[%c0_17, %c0_18] : memref<8x128xbf16, #tpu.memory_space<vmem>>, vector<8x128xbf16>
    tpu.vector_store %arg8[%c0_17, %c0_18], %23 {strides = array<i32>} : memref<8x128xbf16, #tpu.memory_space<vmem>>, vector<8x128xbf16>,
    return
  }
  func.func @transform_0(%arg0: i32) -> (i32, i32) {
    %c0_i32 = arith.constant 0 : i32
    %c0_i32_0 = arith.constant 0 : i32
    return %arg0, %c0_i32 : i32, i32
  }
  func.func @transform_1(%arg0: i32) -> (i32, i32) {
    %c0_i32 = arith.constant 0 : i32
    %c0_i32_0 = arith.constant 0 : i32
    %c0_i32_1 = arith.constant 0 : i32
    return %c0_i32, %c0_i32_0 : i32, i32
  }
  func.func @transform_2(%arg0: i32) -> (i32, i32) {
    %c0_i32 = arith.constant 0 : i32
    %c0_i32_0 = arith.constant 0 : i32
    %c0_i32_1 = arith.constant 0 : i32
    return %c0_i32, %c0_i32_0 : i32, i32
  }
  func.func @transform_3(%arg0: i32) -> (i32, i32) {
    %c0_i32 = arith.constant 0 : i32
    %c0_i32_0 = arith.constant 0 : i32
    %c0_i32_1 = arith.constant 0 : i32
    return %c0_i32, %c0_i32_0 : i32, i32
  }
  func.func @transform_4(%arg0: i32) -> (i32, i32) {
    %c0_i32 = arith.constant 0 : i32
    %c0_i32_0 = arith.constant 0 : i32
    %c0_i32_1 = arith.constant 0 : i32
    return %c0_i32, %c0_i32_0 : i32, i32
  }
  func.func @transform_5(%arg0: i32) -> (i32, i32) {
    %c0_i32 = arith.constant 0 : i32
    %c0_i32_0 = arith.constant 0 : i32
    %c0_i32_1 = arith.constant 0 : i32
    return %c0_i32, %c0_i32_0 : i32, i32
  }
  func.func @transform_6(%arg0: i32) -> (i32, i32) {
    %c0_i32 = arith.constant 0 : i32
    %c0_i32_0 = arith.constant 0 : i32
    %c0_i32_1 = arith.constant 0 : i32
    return %c0_i32, %c0_i32_0 : i32, i32
  }
  func.func @transform_7(%arg0: i32) -> (i32, i32) {
    %c0_i32 = arith.constant 0 : i32
    %c0_i32_0 = arith.constant 0 : i32
    return %arg0, %c0_i32 : i32, i32
  }
}

</mosaic_0001>

<llo_original>
// kernel: classification_head_forward.1
$region0: #{classification_head_forward.1}
  #allocation0 [shape = 'u32[]', space=smem, size = 0x4, offset = 0x4, fixed_abs, tag = 'smem constant byte address 0x4 - core index']
  #allocation1 [shape = 'u32[144,128]{1,0:T(1,128)}', space=vmem, size = 0x12000, scoped, tag = 'internal scratch']
  %s0 = inlined_call_operand.hbm [shape: f32[8,32], index: 0, kind: input, shape index: {}]
  %s1 = inlined_call_operand.hbm [shape: bf16[32,512], index: 1, kind: input, shape index: {}]
  %s2 = inlined_call_operand.hbm [shape: f32[1,512], index: 2, kind: input, shape index: {}]
  %s3 = inlined_call_operand.hbm [shape: bf16[512,256], index: 3, kind: input, shape index: {}]
  %s4 = inlined_call_operand.vmem [shape: f32[1,256], index: 4, kind: input, shape index: {}]
  %s5 = inlined_call_operand.hbm [shape: bf16[256,128], index: 5, kind: input, shape index: {}]
  %s6 = inlined_call_operand.vmem [shape: f32[1,128], index: 6, kind: input, shape index: {}]
  %s7 = inlined_call_operand.vmem [shape: bf16[8,128], index: 7, kind: output, shape index: {}]
  %s8 = sld [smem:[#allocation0]]
  $region58: #{classification_head_forward.1} parent=0
    _
  %s10 = ssub.s32 1, %s8
  %s11 = scalar_select 0, %s10, %s8
  $region1: #{classification_head_forward.1} parent=0
    #allocation2 [shape = 'u8[4096]{0}', space=vmem, size = 0x1000, scoped, tag = 'input window, operand 0, single buffered']
    #allocation3 [shape = 's32[1]{0}', space=sflag, size = 0x4, scoped, tag = 'scoped memory for classification_head_forward.1']
    #allocation4 [shape = 'u8[32768]{0}', space=vmem, size = 0x8000, scoped, tag = 'input window, operand 1, single buffered']
    #allocation5 [shape = 's32[1]{0}', space=sflag, size = 0x4, scoped, tag = 'scoped memory for classification_head_forward.1']
    #allocation6 [shape = 'u8[2048]{0}', space=vmem, size = 0x800, scoped, tag = 'input window, operand 2, single buffered']
    #allocation7 [shape = 'u8[262144]{0}', space=vmem, size = 0x40000, scoped, tag = 'input window, operand 3, single buffered']
    #allocation8 [shape = 's32[1]{0}', space=sflag, size = 0x4, scoped, tag = 'scoped memory for classification_head_forward.1']
    #allocation9 [shape = 'u8[65536]{0}', space=vmem, size = 0x10000, scoped, tag = 'input window, operand 5, single buffered']
    %12 = vsyncpa [#allocation3], 0
    %13 = vsyncpa [#allocation5], 0
    %14 = vsyncpa [#allocation8], 0
    // Predicated region
    $region2: #{classification_head_forward.1} parent=1 // pred_check
      _
    $region3: #{classification_head_forward.1} parent=1 // pred_check_branch
      %16 = sbr.rel (0) target = $region5
    $region4: #{classification_head_forward.1} parent=1 // pred_region
      %s18 = ssub.s32 128, 128
      %19 = vsyncadd [#allocation3], %s18
      %s21 = sshll.u32 [#allocation2], 4
      %s22 = int_to_ptr.vmem [resolvable:$true] %s21
      %24 = dma.hbm_to_vmem [thread:$0]  %s0, 128, %s22, [#allocation3]
    $region5: #{classification_head_forward.1} parent=1 // pred_fallthru
      _
    // Predicated region
    $region6: #{classification_head_forward.1} parent=1 // pred_check
      _
    $region7: #{classification_head_forward.1} parent=1 // pred_check_branch
      %26 = sbr.rel (0) target = $region9
    $region8: #{classification_head_forward.1} parent=1 // pred_region
      %s28 = ssub.s32 1024, 1024
      %29 = vsyncadd [#allocation5], %s28
      %s30 = sshll.u32 [#allocation4], 4
      %s31 = int_to_ptr.vmem [resolvable:$true] %s30
      %36 = dma.hbm_to_vmem [thread:$0]  %s1, 1024, %s31, [#allocation5], 256, 256, 16
    $region9: #{classification_head_forward.1} parent=1 // pred_fallthru
      _
    // Predicated region
    $region10: #{classification_head_forward.1} parent=1 // pred_check
      _
    $region11: #{classification_head_forward.1} parent=1 // pred_check_branch
      %38 = sbr.rel (0) target = $region13
    $region12: #{classification_head_forward.1} parent=1 // pred_region
      %s40 = ssub.s32 64, 64
      %41 = vsyncadd [#allocation5], %s40
      %s43 = sshll.u32 [#allocation6], 4
      %s44 = int_to_ptr.vmem [resolvable:$true] %s43
      %46 = dma.hbm_to_vmem [thread:$0]  %s2, 64, %s44, [#allocation5]
    $region13: #{classification_head_forward.1} parent=1 // pred_fallthru
      _
    // Predicated region
    $region14: #{classification_head_forward.1} parent=1 // pred_check
      _
    $region15: #{classification_head_forward.1} parent=1 // pred_check_branch
      %48 = sbr.rel (0) target = $region17
    $region16: #{classification_head_forward.1} parent=1 // pred_region
      %s50 = ssub.s32 8192, 8192
      %51 = vsyncadd [#allocation8], %s50
      %s52 = sshll.u32 [#allocation7], 4
      %s53 = int_to_ptr.vmem [resolvable:$true] %s52
      %58 = dma.hbm_to_vmem [thread:$0]  %s3, 8192, %s53, [#allocation8], 128, 128, 8
    $region17: #{classification_head_forward.1} parent=1 // pred_fallthru
      _
    // Predicated region
    $region18: #{classification_head_forward.1} parent=1 // pred_check
      _
    $region19: #{classification_head_forward.1} parent=1 // pred_check_branch
      %60 = sbr.rel (0) target = $region21
    $region20: #{classification_head_forward.1} parent=1 // pred_region
      _
    $region21: #{classification_head_forward.1} parent=1 // pred_fallthru
      _
    // Predicated region
    $region22: #{classification_head_forward.1} parent=1 // pred_check
      _
    $region23: #{classification_head_forward.1} parent=1 // pred_check_branch
      %62 = sbr.rel (0) target = $region25
    $region24: #{classification_head_forward.1} parent=1 // pred_region
      %s64 = ssub.s32 2048, 2048
      %65 = vsyncadd [#allocation8], %s64
      %s66 = sshll.u32 [#allocation9], 4
      %s67 = int_to_ptr.vmem [resolvable:$true] %s66
      %72 = dma.hbm_to_vmem [thread:$0]  %s5, 2048, %s67, [#allocation8], 64, 64, 4
    $region25: #{classification_head_forward.1} parent=1 // pred_fallthru
      _
    // Predicated region
    $region26: #{classification_head_forward.1} parent=1 // pred_check
      _
    $region27: #{classification_head_forward.1} parent=1 // pred_check_branch
      %74 = sbr.rel (0) target = $region29
    $region28: #{classification_head_forward.1} parent=1 // pred_region
      _
    $region29: #{classification_head_forward.1} parent=1 // pred_fallthru
      _
    // Predicated region
    $region30: #{classification_head_forward.1} parent=1 // pred_check
      _
    $region31: #{classification_head_forward.1} parent=1 // pred_check_branch
      %76 = sbr.rel (0) target = $region33
    $region32: #{classification_head_forward.1} parent=1 // pred_region
      %77 = dma.done [#allocation3], 128
    $region33: #{classification_head_forward.1} parent=1 // pred_fallthru
      _
    // Predicated region
    $region34: #{classification_head_forward.1} parent=1 // pred_check
      _
    $region35: #{classification_head_forward.1} parent=1 // pred_check_branch
      %79 = sbr.rel (0) target = $region37
    $region36: #{classification_head_forward.1} parent=1 // pred_region
      %80 = dma.done [#allocation5], 1024
    $region37: #{classification_head_forward.1} parent=1 // pred_fallthru
      _
    // Predicated region
    $region38: #{classification_head_forward.1} parent=1 // pred_check
      _
    $region39: #{classification_head_forward.1} parent=1 // pred_check_branch
      %82 = sbr.rel (0) target = $region41
    $region40: #{classification_head_forward.1} parent=1 // pred_region
      %83 = dma.done [#allocation5], 64
    $region41: #{classification_head_forward.1} parent=1 // pred_fallthru
      _
    // Predicated region
    $region42: #{classification_head_forward.1} parent=1 // pred_check
      _
    $region43: #{classification_head_forward.1} parent=1 // pred_check_branch
      %85 = sbr.rel (0) target = $region45
    $region44: #{classification_head_forward.1} parent=1 // pred_region
      %86 = dma.done [#allocation8], 8192
    $region45: #{classification_head_forward.1} parent=1 // pred_fallthru
      _
    // Predicated region
    $region46: #{classification_head_forward.1} parent=1 // pred_check
      _
    $region47: #{classification_head_forward.1} parent=1 // pred_check_branch
      %88 = sbr.rel (0) target = $region49
    $region48: #{classification_head_forward.1} parent=1 // pred_region
      %89 = dma.done [#allocation8], 2048
    $region49: #{classification_head_forward.1} parent=1 // pred_fallthru
      _
    %v91 = vld [vmem:[#allocation2] sm:$0xff]
    %v92 = vpack.c.bf16 %v91, %v91
    %v93 = vld [vmem:[#allocation4] sm:$0xff]
    %v94 = vld [vmem:[#allocation4 + $0x8] sm:$0xff]
    %v95 = vld [vmem:[#allocation4 + $0x10] sm:$0xff]
    %v96 = vld [vmem:[#allocation4 + $0x18] sm:$0xff]
    %v97 = vld [vmem:[#allocation4 + $0x20] sm:$0xff]
    %v98 = vld [vmem:[#allocation4 + $0x28] sm:$0xff]
    %v99 = vld [vmem:[#allocation4 + $0x30] sm:$0xff]
    %v100 = vld [vmem:[#allocation4 + $0x38] sm:$0xff]
    %v101 = vld [vmem:[#allocation6] sm:$0xf]
    %v103 = vlaneseq
    %v104 = vshrl.u32 %v103, 7
    %v105 = vsub.s32 0, %v104
    %v106 = vrot.slane %v101, %v105
    %v107 = vlaneseq
    %v108 = vshrl.u32 %v107, 7
    %v109 = vsub.s32 1, %v108
    %v110 = vrot.slane %v101, %v109
    %v111 = vlaneseq
    %v112 = vshrl.u32 %v111, 7
    %v113 = vsub.s32 2, %v112
    %v114 = vrot.slane %v101, %v113
    %v115 = vlaneseq
    %v116 = vshrl.u32 %v115, 7
    %v117 = vsub.s32 3, %v116
    %v118 = vrot.slane %v101, %v117
    %v131 = vunpack.c.l.b16 %v93
    %v132 = vunpack.c.h.b16 %v93
    %v133 = vunpack.c.l.b16 %v94
    %v134 = vunpack.c.h.b16 %v94
    %v135 = vunpack.c.l.b16 %v95
    %v136 = vunpack.c.h.b16 %v95
    %v137 = vunpack.c.l.b16 %v96
    %v138 = vunpack.c.h.b16 %v96
    %v139 = vunpack.c.l.b16 %v97
    %v140 = vunpack.c.h.b16 %v97
    %v141 = vunpack.c.l.b16 %v98
    %v142 = vunpack.c.h.b16 %v98
    %v143 = vunpack.c.l.b16 %v99
    %v144 = vunpack.c.h.b16 %v99
    %v145 = vunpack.c.l.b16 %v100
    %v146 = vunpack.c.h.b16 %v100
    %v147 = vpack.c.b16 %v135, %v131
    %v148 = vpack.c.b16 %v136, %v132
    %v149 = vpack.c.b16 %v137, %v133
    %v150 = vpack.c.b16 %v138, %v134
    %v151 = vpack.c.b16 %v143, %v139
    %v152 = vpack.c.b16 %v144, %v140
    %v153 = vpack.c.b16 %v145, %v141
    %v154 = vpack.c.b16 %v146, %v142
    %vm163 = vcmask 261120
    %v165 = vsel %vm163, %v92, 0
    %167 = vmatprep.subr.bf16.mxu0 0
    %168 = vmatpush1.bf16.msra.mxu0 0
    %169 = vmatprep.subr.bf16.mxu0 0
    %170 = vmatpush1.bf16.msra.mxu0 0
    %171 = vmatprep.subr.bf16.mxu0 0
    %172 = vmatpush1.bf16.msra.mxu0 0
    %173 = vmatprep.subr.bf16.mxu0 0
    %174 = vmatpush1.bf16.msra.mxu0 0
    %175 = vmatprep.subr.bf16.mxu0 0
    %176 = vmatpush1.bf16.msra.mxu0 0
    %177 = vmatprep.subr.bf16.mxu0 0
    %178 = vmatpush1.bf16.msra.mxu0 0
    %179 = vmatprep.subr.bf16.mxu0 %v152
    %180 = vmatpush1.bf16.msra.mxu0 %v151
    %181 = vmatprep.subr.bf16.mxu0 %v148
    %182 = vmatpush1.bf16.msra.mxu0 %v147
    %183 = vmatprep.subr.bf16.mxu0 0
    %184 = vmatpush2.bf16.msra.mxu0 0
    %185 = vmatprep.subr.bf16.mxu0 0
    %186 = vmatpush2.bf16.msra.mxu0 0
    %187 = vmatprep.subr.bf16.mxu0 0
    %188 = vmatpush2.bf16.msra.mxu0 0
    %189 = vmatprep.subr.bf16.mxu0 0
    %190 = vmatpush2.bf16.msra.mxu0 0
    %191 = vmatprep.subr.bf16.mxu0 0
    %192 = vmatpush2.bf16.msra.mxu0 0
    %193 = vmatprep.subr.bf16.mxu0 0
    %194 = vmatpush2.bf16.msra.mxu0 0
    %195 = vmatprep.subr.bf16.mxu0 0
    %196 = vmatpush2.bf16.msra.mxu0 0
    %197 = vmatprep.subr.bf16.mxu0 0
    %198 = vmatpush2.bf16.msra.mxu0 0
    %199 = vmatprep.mubr.bf16.mxu0 0
    %200 = vmatmul.mubr.bf16.gmra.mxu0 %v165
    %v201 = vpop.f32.mrf.mxu0
    %v202 = vadd.f32 %v106, %v201
    %v203 = vpop.f32.mrf.mxu0
    %v204 = vadd.f32 %v110, %v203
    %v205 = vpop.f32.mrf.mxu0
    %v206 = vpop.f32.mrf.mxu0
    %207 = vdwg.mxu0
    %208 = vmatprep.subr.bf16.mxu0 0
    %209 = vmatpush1.bf16.msra.mxu0 0
    %210 = vmatprep.subr.bf16.mxu0 0
    %211 = vmatpush1.bf16.msra.mxu0 0
    %212 = vmatprep.subr.bf16.mxu0 0
    %213 = vmatpush1.bf16.msra.mxu0 0
    %214 = vmatprep.subr.bf16.mxu0 0
    %215 = vmatpush1.bf16.msra.mxu0 0
    %216 = vmatprep.subr.bf16.mxu0 0
    %217 = vmatpush1.bf16.msra.mxu0 0
    %218 = vmatprep.subr.bf16.mxu0 0
    %219 = vmatpush1.bf16.msra.mxu0 0
    %220 = vmatprep.subr.bf16.mxu0 %v154
    %221 = vmatpush1.bf16.msra.mxu0 %v153
    %222 = vmatprep.subr.bf16.mxu0 %v150
    %223 = vmatpush1.bf16.msra.mxu0 %v149
    %224 = vmatprep.subr.bf16.mxu0 0
    %225 = vmatpush2.bf16.msra.mxu0 0
    %226 = vmatprep.subr.bf16.mxu0 0
    %227 = vmatpush2.bf16.msra.mxu0 0
    %228 = vmatprep.subr.bf16.mxu0 0
    %229 = vmatpush2.bf16.msra.mxu0 0
    %230 = vmatprep.subr.bf16.mxu0 0
    %231 = vmatpush2.bf16.msra.mxu0 0
    %232 = vmatprep.subr.bf16.mxu0 0
    %233 = vmatpush2.bf16.msra.mxu0 0
    %234 = vmatprep.subr.bf16.mxu0 0
    %235 = vmatpush2.bf16.msra.mxu0 0
    %236 = vmatprep.subr.bf16.mxu0 0
    %237 = vmatpush2.bf16.msra.mxu0 0
    %238 = vmatprep.subr.bf16.mxu0 0
    %239 = vmatpush2.bf16.msra.mxu0 0
    %240 = vmatprep.mubr.bf16.mxu0 0
    %241 = vmatmul.mubr.bf16.gmra.mxu0 %v165
    %v242 = vpop.f32.mrf.mxu0
    %v243 = vadd.f32 %v114, %v242
    %v244 = vpop.f32.mrf.mxu0
    %v245 = vadd.f32 %v118, %v244
    %v246 = vpop.f32.mrf.mxu0
    %v247 = vpop.f32.mrf.mxu0
    %248 = vdwg.mxu0
    %v249 = vmax.f32 %v202, 0.0
    %v250 = vmax.f32 %v204, 0.0
    %v251 = vmax.f32 %v243, 0.0
    %v252 = vmax.f32 %v245, 0.0
    %v253 = vpack.c.bf16 %v249, %v249
    %v254 = vpack.c.bf16 %v250, %v250
    %v255 = vpack.c.bf16 %v251, %v251
    %v256 = vpack.c.bf16 %v252, %v252
    %v257 = vld [vmem:[#allocation7] sm:$0xff]
    %v258 = vld [vmem:[#allocation7 + $0x8] sm:$0xff]
    %v259 = vld [vmem:[#allocation7 + $0x10] sm:$0xff]
    %v260 = vld [vmem:[#allocation7 + $0x18] sm:$0xff]
    %v261 = vld [vmem:[#allocation7 + $0x20] sm:$0xff]
    %v262 = vld [vmem:[#allocation7 + $0x28] sm:$0xff]
    %v263 = vld [vmem:[#allocation7 + $0x30] sm:$0xff]
    %v264 = vld [vmem:[#allocation7 + $0x38] sm:$0xff]
    %v265 = vld [vmem:[#allocation7 + $0x40] sm:$0xff]
    %v266 = vld [vmem:[#allocation7 + $0x48] sm:$0xff]
    %v267 = vld [vmem:[#allocation7 + $0x50] sm:$0xff]
    %v268 = vld [vmem:[#allocation7 + $0x58] sm:$0xff]
    %v269 = vld [vmem:[#allocation7 + $0x60] sm:$0xff]
    %v270 = vld [vmem:[#allocation7 + $0x68] sm:$0xff]
    %v271 = vld [vmem:[#allocation7 + $0x70] sm:$0xff]
    %v272 = vld [vmem:[#allocation7 + $0x78] sm:$0xff]
    %v273 = vld [vmem:[#allocation7 + $0x80] sm:$0xff]
    %v274 = vld [vmem:[#allocation7 + $0x88] sm:$0xff]
    %v275 = vld [vmem:[#allocation7 + $0x90] sm:$0xff]
    %v276 = vld [vmem:[#allocation7 + $0x98] sm:$0xff]
    %v277 = vld [vmem:[#allocation7 + $0xa0] sm:$0xff]
    %v278 = vld [vmem:[#allocation7 + $0xa8] sm:$0xff]
    %v279 = vld [vmem:[#allocation7 + $0xb0] sm:$0xff]
    %v280 = vld [vmem:[#allocation7 + $0xb8] sm:$0xff]
    %v281 = vld [vmem:[#allocation7 + $0xc0] sm:$0xff]
    %v282 = vld [vmem:[#allocation7 + $0xc8] sm:$0xff]
    %v283 = vld [vmem:[#allocation7 + $0xd0] sm:$0xff]
    %v284 = vld [vmem:[#allocation7 + $0xd8] sm:$0xff]
    %v285 = vld [vmem:[#allocation7 + $0xe0] sm:$0xff]
    %v286 = vld [vmem:[#allocation7 + $0xe8] sm:$0xff]
    %v287 = vld [vmem:[#allocation7 + $0xf0] sm:$0xff]
    %v288 = vld [vmem:[#allocation7 + $0xf8] sm:$0xff]
    %v289 = vld [vmem:[#allocation7 + $0x100] sm:$0xff]
    %v290 = vld [vmem:[#allocation7 + $0x108] sm:$0xff]
    %v291 = vld [vmem:[#allocation7 + $0x110] sm:$0xff]
    %v292 = vld [vmem:[#allocation7 + $0x118] sm:$0xff]
    %v293 = vld [vmem:[#allocation7 + $0x120] sm:$0xff]
    %v294 = vld [vmem:[#allocation7 + $0x128] sm:$0xff]
    %v295 = vld [vmem:[#allocation7 + $0x130] sm:$0xff]
    %v296 = vld [vmem:[#allocation7 + $0x138] sm:$0xff]
    %v297 = vld [vmem:[#allocation7 + $0x140] sm:$0xff]
    %v298 = vld [vmem:[#allocation7 + $0x148] sm:$0xff]
    %v299 = vld [vmem:[#allocation7 + $0x150] sm:$0xff]
    %v300 = vld [vmem:[#allocation7 + $0x158] sm:$0xff]
    %v301 = vld [vmem:[#allocation7 + $0x160] sm:$0xff]
    %v302 = vld [vmem:[#allocation7 + $0x168] sm:$0xff]
    %v303 = vld [vmem:[#allocation7 + $0x170] sm:$0xff]
    %v304 = vld [vmem:[#allocation7 + $0x178] sm:$0xff]
    %v305 = vld [vmem:[#allocation7 + $0x180] sm:$0xff]
    %v306 = vld [vmem:[#allocation7 + $0x188] sm:$0xff]
    %v307 = vld [vmem:[#allocation7 + $0x190] sm:$0xff]
    %v308 = vld [vmem:[#allocation7 + $0x198] sm:$0xff]
    %v309 = vld [vmem:[#allocation7 + $0x1a0] sm:$0xff]
    %v310 = vld [vmem:[#allocation7 + $0x1a8] sm:$0xff]
    %v311 = vld [vmem:[#allocation7 + $0x1b0] sm:$0xff]
    %v312 = vld [vmem:[#allocation7 + $0x1b8] sm:$0xff]
    %v313 = vld [vmem:[#allocation7 + $0x1c0] sm:$0xff]
    %v314 = vld [vmem:[#allocation7 + $0x1c8] sm:$0xff]
    %v315 = vld [vmem:[#allocation7 + $0x1d0] sm:$0xff]
    %v316 = vld [vmem:[#allocation7 + $0x1d8] sm:$0xff]
    %v317 = vld [vmem:[#allocation7 + $0x1e0] sm:$0xff]
    %v318 = vld [vmem:[#allocation7 + $0x1e8] sm:$0xff]
    %v319 = vld [vmem:[#allocation7 + $0x1f0] sm:$0xff]
    %v320 = vld [vmem:[#allocation7 + $0x1f8] sm:$0xff]
    %v321 = vld [vmem:[%s4] sm:$0x3]
    %v323 = vlaneseq
    %v324 = vshrl.u32 %v323, 7
    %v325 = vsub.s32 0, %v324
    %v326 = vrot.slane %v321, %v325
    %v327 = vlaneseq
    %v328 = vshrl.u32 %v327, 7
    %v329 = vsub.s32 1, %v328
    %v330 = vrot.slane %v321, %v329
    %v397 = vunpack.c.l.b16 %v257
    %v398 = vunpack.c.h.b16 %v257
    %v399 = vunpack.c.l.b16 %v258
    %v400 = vunpack.c.h.b16 %v258
    %v401 = vunpack.c.l.b16 %v259
    %v402 = vunpack.c.h.b16 %v259
    %v403 = vunpack.c.l.b16 %v260
    %v404 = vunpack.c.h.b16 %v260
    %v405 = vunpack.c.l.b16 %v261
    %v406 = vunpack.c.h.b16 %v261
    %v407 = vunpack.c.l.b16 %v262
    %v408 = vunpack.c.h.b16 %v262
    %v409 = vunpack.c.l.b16 %v263
    %v410 = vunpack.c.h.b16 %v263
    %v411 = vunpack.c.l.b16 %v264
    %v412 = vunpack.c.h.b16 %v264
    %v413 = vunpack.c.l.b16 %v265
    %v414 = vunpack.c.h.b16 %v265
    %v415 = vunpack.c.l.b16 %v266
    %v416 = vunpack.c.h.b16 %v266
    %v417 = vunpack.c.l.b16 %v267
    %v418 = vunpack.c.h.b16 %v267
    %v419 = vunpack.c.l.b16 %v268
    %v420 = vunpack.c.h.b16 %v268
    %v421 = vunpack.c.l.b16 %v269
    %v422 = vunpack.c.h.b16 %v269
    %v423 = vunpack.c.l.b16 %v270
    %v424 = vunpack.c.h.b16 %v270
    %v425 = vunpack.c.l.b16 %v271
    %v426 = vunpack.c.h.b16 %v271
    %v427 = vunpack.c.l.b16 %v272
    %v428 = vunpack.c.h.b16 %v272
    %v429 = vunpack.c.l.b16 %v273
    %v430 = vunpack.c.h.b16 %v273
    %v431 = vunpack.c.l.b16 %v274
    %v432 = vunpack.c.h.b16 %v274
    %v433 = vunpack.c.l.b16 %v275
    %v434 = vunpack.c.h.b16 %v275
    %v435 = vunpack.c.l.b16 %v276
    %v436 = vunpack.c.h.b16 %v276
    %v437 = vunpack.c.l.b16 %v277
    %v438 = vunpack.c.h.b16 %v277
    %v439 = vunpack.c.l.b16 %v278
    %v440 = vunpack.c.h.b16 %v278
    %v441 = vunpack.c.l.b16 %v279
    %v442 = vunpack.c.h.b16 %v279
    %v443 = vunpack.c.l.b16 %v280
    %v444 = vunpack.c.h.b16 %v280
    %v445 = vunpack.c.l.b16 %v281
    %v446 = vunpack.c.h.b16 %v281
    %v447 = vunpack.c.l.b16 %v282
    %v448 = vunpack.c.h.b16 %v282
    %v449 = vunpack.c.l.b16 %v283
    %v450 = vunpack.c.h.b16 %v283
    %v451 = vunpack.c.l.b16 %v284
    %v452 = vunpack.c.h.b16 %v284
    %v453 = vunpack.c.l.b16 %v285
    %v454 = vunpack.c.h.b16 %v285
    %v455 = vunpack.c.l.b16 %v286
    %v456 = vunpack.c.h.b16 %v286
    %v457 = vunpack.c.l.b16 %v287
    %v458 = vunpack.c.h.b16 %v287
    %v459 = vunpack.c.l.b16 %v288
    %v460 = vunpack.c.h.b16 %v288
    %v461 = vunpack.c.l.b16 %v289
    %v462 = vunpack.c.h.b16 %v289
    %v463 = vunpack.c.l.b16 %v290
    %v464 = vunpack.c.h.b16 %v290
    %v465 = vunpack.c.l.b16 %v291
    %v466 = vunpack.c.h.b16 %v291
    %v467 = vunpack.c.l.b16 %v292
    %v468 = vunpack.c.h.b16 %v292
    %v469 = vunpack.c.l.b16 %v293
    %v470 = vunpack.c.h.b16 %v293
    %v471 = vunpack.c.l.b16 %v294
    %v472 = vunpack.c.h.b16 %v294
    %v473 = vunpack.c.l.b16 %v295
    %v474 = vunpack.c.h.b16 %v295
    %v475 = vunpack.c.l.b16 %v296
    %v476 = vunpack.c.h.b16 %v296
    %v477 = vunpack.c.l.b16 %v297
    %v478 = vunpack.c.h.b16 %v297
    %v479 = vunpack.c.l.b16 %v298
    %v480 = vunpack.c.h.b16 %v298
    %v481 = vunpack.c.l.b16 %v299
    %v482 = vunpack.c.h.b16 %v299
    %v483 = vunpack.c.l.b16 %v300
    %v484 = vunpack.c.h.b16 %v300
    %v485 = vunpack.c.l.b16 %v301
    %v486 = vunpack.c.h.b16 %v301
    %v487 = vunpack.c.l.b16 %v302
    %v488 = vunpack.c.h.b16 %v302
    %v489 = vunpack.c.l.b16 %v303
    %v490 = vunpack.c.h.b16 %v303
    %v491 = vunpack.c.l.b16 %v304
    %v492 = vunpack.c.h.b16 %v304
    %v493 = vunpack.c.l.b16 %v305
    %v494 = vunpack.c.h.b16 %v305
    %v495 = vunpack.c.l.b16 %v306
    %v496 = vunpack.c.h.b16 %v306
    %v497 = vunpack.c.l.b16 %v307
    %v498 = vunpack.c.h.b16 %v307
    %v499 = vunpack.c.l.b16 %v308
    %v500 = vunpack.c.h.b16 %v308
    %v501 = vunpack.c.l.b16 %v309
    %v502 = vunpack.c.h.b16 %v309
    %v503 = vunpack.c.l.b16 %v310
    %v504 = vunpack.c.h.b16 %v310
    %v505 = vunpack.c.l.b16 %v311
    %v506 = vunpack.c.h.b16 %v311
    %v507 = vunpack.c.l.b16 %v312
    %v508 = vunpack.c.h.b16 %v312
    %v509 = vunpack.c.l.b16 %v313
    %v510 = vunpack.c.h.b16 %v313
    %v511 = vunpack.c.l.b16 %v314
    %v512 = vunpack.c.h.b16 %v314
    %v513 = vunpack.c.l.b16 %v315
    %v514 = vunpack.c.h.b16 %v315
    %v515 = vunpack.c.l.b16 %v316
    %v516 = vunpack.c.h.b16 %v316
    %v517 = vunpack.c.l.b16 %v317
    %v518 = vunpack.c.h.b16 %v317
    %v519 = vunpack.c.l.b16 %v318
    %v520 = vunpack.c.h.b16 %v318
    %v521 = vunpack.c.l.b16 %v319
    %v522 = vunpack.c.h.b16 %v319
    %v523 = vunpack.c.l.b16 %v320
    %v524 = vunpack.c.h.b16 %v320
    %v525 = vpack.c.b16 %v399, %v397
    %v526 = vpack.c.b16 %v400, %v398
    %v527 = vpack.c.b16 %v403, %v401
    %v528 = vpack.c.b16 %v404, %v402
    %v529 = vpack.c.b16 %v407, %v405
    %v530 = vpack.c.b16 %v408, %v406
    %v531 = vpack.c.b16 %v411, %v409
    %v532 = vpack.c.b16 %v412, %v410
    %v533 = vpack.c.b16 %v415, %v413
    %v534 = vpack.c.b16 %v416, %v414
    %v535 = vpack.c.b16 %v419, %v417
    %v536 = vpack.c.b16 %v420, %v418
    %v537 = vpack.c.b16 %v423, %v421
    %v538 = vpack.c.b16 %v424, %v422
    %v539 = vpack.c.b16 %v427, %v425
    %v540 = vpack.c.b16 %v428, %v426
    %v541 = vpack.c.b16 %v431, %v429
    %v542 = vpack.c.b16 %v432, %v430
    %v543 = vpack.c.b16 %v435, %v433
    %v544 = vpack.c.b16 %v436, %v434
    %v545 = vpack.c.b16 %v439, %v437
    %v546 = vpack.c.b16 %v440, %v438
    %v547 = vpack.c.b16 %v443, %v441
    %v548 = vpack.c.b16 %v444, %v442
    %v549 = vpack.c.b16 %v447, %v445
    %v550 = vpack.c.b16 %v448, %v446
    %v551 = vpack.c.b16 %v451, %v449
    %v552 = vpack.c.b16 %v452, %v450
    %v553 = vpack.c.b16 %v455, %v453
    %v554 = vpack.c.b16 %v456, %v454
    %v555 = vpack.c.b16 %v459, %v457
    %v556 = vpack.c.b16 %v460, %v458
    %v557 = vpack.c.b16 %v463, %v461
    %v558 = vpack.c.b16 %v464, %v462
    %v559 = vpack.c.b16 %v467, %v465
    %v560 = vpack.c.b16 %v468, %v466
    %v561 = vpack.c.b16 %v471, %v469
    %v562 = vpack.c.b16 %v472, %v470
    %v563 = vpack.c.b16 %v475, %v473
    %v564 = vpack.c.b16 %v476, %v474
    %v565 = vpack.c.b16 %v479, %v477
    %v566 = vpack.c.b16 %v480, %v478
    %v567 = vpack.c.b16 %v483, %v481
    %v568 = vpack.c.b16 %v484, %v482
    %v569 = vpack.c.b16 %v487, %v485
    %v570 = vpack.c.b16 %v488, %v486
    %v571 = vpack.c.b16 %v491, %v489
    %v572 = vpack.c.b16 %v492, %v490
    %v573 = vpack.c.b16 %v495, %v493
    %v574 = vpack.c.b16 %v496, %v494
    %v575 = vpack.c.b16 %v499, %v497
    %v576 = vpack.c.b16 %v500, %v498
    %v577 = vpack.c.b16 %v503, %v501
    %v578 = vpack.c.b16 %v504, %v502
    %v579 = vpack.c.b16 %v507, %v505
    %v580 = vpack.c.b16 %v508, %v506
    %v581 = vpack.c.b16 %v511, %v509
    %v582 = vpack.c.b16 %v512, %v510
    %v583 = vpack.c.b16 %v515, %v513
    %v584 = vpack.c.b16 %v516, %v514
    %v585 = vpack.c.b16 %v519, %v517
    %v586 = vpack.c.b16 %v520, %v518
    %v587 = vpack.c.b16 %v523, %v521
    %v588 = vpack.c.b16 %v524, %v522
    %653 = vmatprep.subr.bf16.mxu0 %v540
    %654 = vmatpush1.bf16.msra.mxu0 %v539
    %655 = vmatprep.subr.bf16.mxu0 %v538
    %656 = vmatpush1.bf16.msra.mxu0 %v537
    %657 = vmatprep.subr.bf16.mxu0 %v536
    %658 = vmatpush1.bf16.msra.mxu0 %v535
    %659 = vmatprep.subr.bf16.mxu0 %v534
    %660 = vmatpush1.bf16.msra.mxu0 %v533
    %661 = vmatprep.subr.bf16.mxu0 %v532
    %662 = vmatpush1.bf16.msra.mxu0 %v531
    %663 = vmatprep.subr.bf16.mxu0 %v530
    %664 = vmatpush1.bf16.msra.mxu0 %v529
    %665 = vmatprep.subr.bf16.mxu0 %v528
    %666 = vmatpush1.bf16.msra.mxu0 %v527
    %667 = vmatprep.subr.bf16.mxu0 %v526
    %668 = vmatpush1.bf16.msra.mxu0 %v525
    %669 = vmatprep.subr.bf16.mxu0 %v556
    %670 = vmatpush2.bf16.msra.mxu0 %v555
    %671 = vmatprep.subr.bf16.mxu0 %v554
    %672 = vmatpush2.bf16.msra.mxu0 %v553
    %673 = vmatprep.subr.bf16.mxu0 %v552
    %674 = vmatpush2.bf16.msra.mxu0 %v551
    %675 = vmatprep.subr.bf16.mxu0 %v550
    %676 = vmatpush2.bf16.msra.mxu0 %v549
    %677 = vmatprep.subr.bf16.mxu0 %v548
    %678 = vmatpush2.bf16.msra.mxu0 %v547
    %679 = vmatprep.subr.bf16.mxu0 %v546
    %680 = vmatpush2.bf16.msra.mxu0 %v545
    %681 = vmatprep.subr.bf16.mxu0 %v544
    %682 = vmatpush2.bf16.msra.mxu0 %v543
    %683 = vmatprep.subr.bf16.mxu0 %v542
    %684 = vmatpush2.bf16.msra.mxu0 %v541
    %685 = vmatprep.mubr.bf16.mxu0 %v254
    %686 = vmatmul.mubr.bf16.gmra.mxu0 %v253
    %v687 = vpop.f32.mrf.mxu0
    %v688 = vadd.f32 %v326, %v687
    %v689 = vpop.f32.mrf.mxu0
    %v690 = vadd.f32 %v330, %v689
    %v691 = vpop.f32.mrf.mxu0
    %v692 = vpop.f32.mrf.mxu0
    %693 = vdwg.mxu0
    %694 = vmatprep.subr.bf16.mxu0 %v572
    %695 = vmatpush1.bf16.msra.mxu0 %v571
    %696 = vmatprep.subr.bf16.mxu0 %v570
    %697 = vmatpush1.bf16.msra.mxu0 %v569
    %698 = vmatprep.subr.bf16.mxu0 %v568
    %699 = vmatpush1.bf16.msra.mxu0 %v567
    %700 = vmatprep.subr.bf16.mxu0 %v566
    %701 = vmatpush1.bf16.msra.mxu0 %v565
    %702 = vmatprep.subr.bf16.mxu0 %v564
    %703 = vmatpush1.bf16.msra.mxu0 %v563
    %704 = vmatprep.subr.bf16.mxu0 %v562
    %705 = vmatpush1.bf16.msra.mxu0 %v561
    %706 = vmatprep.subr.bf16.mxu0 %v560
    %707 = vmatpush1.bf16.msra.mxu0 %v559
    %708 = vmatprep.subr.bf16.mxu0 %v558
    %709 = vmatpush1.bf16.msra.mxu0 %v557
    %710 = vmatprep.subr.bf16.mxu0 %v588
    %711 = vmatpush2.bf16.msra.mxu0 %v587
    %712 = vmatprep.subr.bf16.mxu0 %v586
    %713 = vmatpush2.bf16.msra.mxu0 %v585
    %714 = vmatprep.subr.bf16.mxu0 %v584
    %715 = vmatpush2.bf16.msra.mxu0 %v583
    %716 = vmatprep.subr.bf16.mxu0 %v582
    %717 = vmatpush2.bf16.msra.mxu0 %v581
    %718 = vmatprep.subr.bf16.mxu0 %v580
    %719 = vmatpush2.bf16.msra.mxu0 %v579
    %720 = vmatprep.subr.bf16.mxu0 %v578
    %721 = vmatpush2.bf16.msra.mxu0 %v577
    %722 = vmatprep.subr.bf16.mxu0 %v576
    %723 = vmatpush2.bf16.msra.mxu0 %v575
    %724 = vmatprep.subr.bf16.mxu0 %v574
    %725 = vmatpush2.bf16.msra.mxu0 %v573
    %726 = vmatprep.mubr.bf16.mxu0 %v256
    %727 = vmatmul.mubr.bf16.gmra.mxu0 %v255
    %v728 = vpop.f32.mrf.mxu0
    %v729 = vadd.f32 %v688, %v728
    %v730 = vpop.f32.mrf.mxu0
    %v731 = vadd.f32 %v690, %v730
    %v732 = vpop.f32.mrf.mxu0
    %v733 = vpop.f32.mrf.mxu0
    %734 = vdwg.mxu0
    %v735 = vmax.f32 %v729, 0.0
    %v736 = vmax.f32 %v731, 0.0
    %v737 = vpack.c.bf16 %v735, %v735
    %v738 = vpack.c.bf16 %v736, %v736
    %v739 = vld [vmem:[#allocation9] sm:$0xf]
    %v740 = vld [vmem:[#allocation9 + $0x4] sm:$0xf]
    %v741 = vld [vmem:[#allocation9 + $0x8] sm:$0xf]
    %v742 = vld [vmem:[#allocation9 + $0xc] sm:$0xf]
    %v743 = vld [vmem:[#allocation9 + $0x10] sm:$0xf]
    %v744 = vld [vmem:[#allocation9 + $0x14] sm:$0xf]
    %v745 = vld [vmem:[#allocation9 + $0x18] sm:$0xf]
    %v746 = vld [vmem:[#allocation9 + $0x1c] sm:$0xf]
    %v747 = vld [vmem:[#allocation9 + $0x20] sm:$0xf]
    %v748 = vld [vmem:[#allocation9 + $0x24] sm:$0xf]
    %v749 = vld [vmem:[#allocation9 + $0x28] sm:$0xf]
    %v750 = vld [vmem:[#allocation9 + $0x2c] sm:$0xf]
    %v751 = vld [vmem:[#allocation9 + $0x30] sm:$0xf]
    %v752 = vld [vmem:[#allocation9 + $0x34] sm:$0xf]
    %v753 = vld [vmem:[#allocation9 + $0x38] sm:$0xf]
    %v754 = vld [vmem:[#allocation9 + $0x3c] sm:$0xf]
    %v755 = vld [vmem:[#allocation9 + $0x40] sm:$0xf]
    %v756 = vld [vmem:[#allocation9 + $0x44] sm:$0xf]
    %v757 = vld [vmem:[#allocation9 + $0x48] sm:$0xf]
    %v758 = vld [vmem:[#allocation9 + $0x4c] sm:$0xf]
    %v759 = vld [vmem:[#allocation9 + $0x50] sm:$0xf]
    %v760 = vld [vmem:[#allocation9 + $0x54] sm:$0xf]
    %v761 = vld [vmem:[#allocation9 + $0x58] sm:$0xf]
    %v762 = vld [vmem:[#allocation9 + $0x5c] sm:$0xf]
    %v763 = vld [vmem:[#allocation9 + $0x60] sm:$0xf]
    %v764 = vld [vmem:[#allocation9 + $0x64] sm:$0xf]
    %v765 = vld [vmem:[#allocation9 + $0x68] sm:$0xf]
    %v766 = vld [vmem:[#allocation9 + $0x6c] sm:$0xf]
    %v767 = vld [vmem:[#allocation9 + $0x70] sm:$0xf]
    %v768 = vld [vmem:[#allocation9 + $0x74] sm:$0xf]
    %v769 = vld [vmem:[#allocation9 + $0x78] sm:$0xf]
    %v770 = vld [vmem:[#allocation9 + $0x7c] sm:$0xf]
    %v771 = vld [vmem:[%s6] sm:$0x1]
    %v773 = vlaneseq
    %v774 = vshrl.u32 %v773, 7
    %v775 = vsub.s32 0, %v774
    %v776 = vrot.slane %v771, %v775
    %v810 = vunpack.c.l.b16 %v739
    %v811 = vunpack.c.l.b16 %v740
    %v812 = vunpack.c.l.b16 %v741
    %v813 = vunpack.c.l.b16 %v742
    %v814 = vunpack.c.l.b16 %v743
    %v815 = vunpack.c.l.b16 %v744
    %v816 = vunpack.c.l.b16 %v745
    %v817 = vunpack.c.l.b16 %v746
    %v818 = vunpack.c.l.b16 %v747
    %v819 = vunpack.c.l.b16 %v748
    %v820 = vunpack.c.l.b16 %v749
    %v821 = vunpack.c.l.b16 %v750
    %v822 = vunpack.c.l.b16 %v751
    %v823 = vunpack.c.l.b16 %v752
    %v824 = vunpack.c.l.b16 %v753
    %v825 = vunpack.c.l.b16 %v754
    %v826 = vunpack.c.l.b16 %v755
    %v827 = vunpack.c.l.b16 %v756
    %v828 = vunpack.c.l.b16 %v757
    %v829 = vunpack.c.l.b16 %v758
    %v830 = vunpack.c.l.b16 %v759
    %v831 = vunpack.c.l.b16 %v760
    %v832 = vunpack.c.l.b16 %v761
    %v833 = vunpack.c.l.b16 %v762
    %v834 = vunpack.c.l.b16 %v763
    %v835 = vunpack.c.l.b16 %v764
    %v836 = vunpack.c.l.b16 %v765
    %v837 = vunpack.c.l.b16 %v766
    %v838 = vunpack.c.l.b16 %v767
    %v839 = vunpack.c.l.b16 %v768
    %v840 = vunpack.c.l.b16 %v769
    %v841 = vunpack.c.l.b16 %v770
    %v842 = vpack.c.b16 %v811, %v810
    %v843 = vpack.c.b16 %v813, %v812
    %v844 = vpack.c.b16 %v815, %v814
    %v845 = vpack.c.b16 %v817, %v816
    %v846 = vpack.c.b16 %v819, %v818
    %v847 = vpack.c.b16 %v821, %v820
    %v848 = vpack.c.b16 %v823, %v822
    %v849 = vpack.c.b16 %v825, %v824
    %v850 = vpack.c.b16 %v827, %v826
    %v851 = vpack.c.b16 %v829, %v828
    %v852 = vpack.c.b16 %v831, %v830
    %v853 = vpack.c.b16 %v833, %v832
    %v854 = vpack.c.b16 %v835, %v834
    %v855 = vpack.c.b16 %v837, %v836
    %v856 = vpack.c.b16 %v839, %v838
    %v857 = vpack.c.b16 %v841, %v840
    %874 = vmatprep.subr.bf16.mxu0 0
    %875 = vmatpush1.bf16.msra.mxu0 %v849
    %876 = vmatprep.subr.bf16.mxu0 0
    %877 = vmatpush1.bf16.msra.mxu0 %v848
    %878 = vmatprep.subr.bf16.mxu0 0
    %879 = vmatpush1.bf16.msra.mxu0 %v847
    %880 = vmatprep.subr.bf16.mxu0 0
    %881 = vmatpush1.bf16.msra.mxu0 %v846
    %882 = vmatprep.subr.bf16.mxu0 0
    %883 = vmatpush1.bf16.msra.mxu0 %v845
    %884 = vmatprep.subr.bf16.mxu0 0
    %885 = vmatpush1.bf16.msra.mxu0 %v844
    %886 = vmatprep.subr.bf16.mxu0 0
    %887 = vmatpush1.bf16.msra.mxu0 %v843
    %888 = vmatprep.subr.bf16.mxu0 0
    %889 = vmatpush1.bf16.msra.mxu0 %v842
    %890 = vmatprep.subr.bf16.mxu0 0
    %891 = vmatpush2.bf16.msra.mxu0 %v857
    %892 = vmatprep.subr.bf16.mxu0 0
    %893 = vmatpush2.bf16.msra.mxu0 %v856
    %894 = vmatprep.subr.bf16.mxu0 0
    %895 = vmatpush2.bf16.msra.mxu0 %v855
    %896 = vmatprep.subr.bf16.mxu0 0
    %897 = vmatpush2.bf16.msra.mxu0 %v854
    %898 = vmatprep.subr.bf16.mxu0 0
    %899 = vmatpush2.bf16.msra.mxu0 %v853
    %900 = vmatprep.subr.bf16.mxu0 0
    %901 = vmatpush2.bf16.msra.mxu0 %v852
    %902 = vmatprep.subr.bf16.mxu0 0
    %903 = vmatpush2.bf16.msra.mxu0 %v851
    %904 = vmatprep.subr.bf16.mxu0 0
    %905 = vmatpush2.bf16.msra.mxu0 %v850
    %906 = vmatprep.mubr.bf16.mxu0 %v738
    %907 = vmatmul.mubr.bf16.gmra.mxu0 %v737
    %v908 = vpop.f32.mrf.mxu0
    %v909 = vadd.f32 %v776, %v908
    %v910 = vpop.f32.mrf.mxu0
    %v911 = vpop.f32.mrf.mxu0
    %v912 = vpop.f32.mrf.mxu0
    %913 = vdwg.mxu0
    %v914 = vpack.c.bf16 %v909, %v909
    %915 = vst [vmem:[%s7] sm:$0xf] %v914
    // Predicated region
    $region50: #{classification_head_forward.1} parent=1 // pred_check
      _
    $region51: #{classification_head_forward.1} parent=1 // pred_check_branch
      %917 = sbr.rel (0) target = $region53
    $region52: #{classification_head_forward.1} parent=1 // pred_region
      _
    $region53: #{classification_head_forward.1} parent=1 // pred_fallthru
      _
    // Predicated region
    $region54: #{classification_head_forward.1} parent=1 // pred_check
      _
    $region55: #{classification_head_forward.1} parent=1 // pred_check_branch
      %919 = sbr.rel (0) target = $region57
    $region56: #{classification_head_forward.1} parent=1 // pred_region
      _
    $region57: #{classification_head_forward.1} parent=1 // pred_fallthru
      _
    %920 = vsyncpa [#allocation3], 1
    %921 = vsyncpa [#allocation5], 1
    %922 = vsyncpa [#allocation8], 1

</llo_original>
